<compile_context>
chip_gen: v7x
topology: tpu7x:2x2x1
jax: 0.10.0
libtpu: 0.0.40
codegen_flags: <defaults>
</compile_context>

<pallas_src>
import math

import jax
import jax.numpy as jnp
from jax.experimental import pallas as pl
from jax.experimental.pallas import tpu as pltpu


_TILE_BYTES = 8 * 1024 * 1024          # per output block (x2 pipeline buffers)
_VMEM_LIMIT_BYTES = 32 * 1024 * 1024   # raised scoped-VMEM budget; safe on v5e/v6e/v7x
_MIN_PALLAS_OUT_BYTES = 64 * 1024      # below this the call is launch-overhead bound -> jnp
_MAX_PACK = 32                         # cap on batch rows packed per lane row


def _round_up(x: int, m: int) -> int:
    return (x + m - 1) // m * m


def _sinusoidal_kernel(t_ref, r_ref, out_ref):
    # t_ref:   (TB, pack)       f32 -- `pack` timesteps packed per lane-dense row
    # r_ref:   (pack+1, width)  f32 -- rows 0..pack-1: W, the freq-weighted lane-group
    #                                   selection matrix (W[p,l] = freq_full[l % dim] if
    #                                   l//dim == p else 0); row pack: phase row
    #                                   (0 for the sin half, pi/2 for the cos half).
    # out_ref: (TB, width)      f32 -- width = pack*dim (lane-dense, multiple of 128,
    #                                   except in the rare ragged-dim fallback).
    pack = t_ref.shape[1]
    t = t_ref[...]                                   # (TB, pack)
    w = r_ref[0:pack, :]                             # (pack, width), resident
    phase = r_ref[pack:pack + 1, :]                  # (1, width), resident

    if pack == 1:
        # Pure VPU lane-broadcast outer product; exact f32, no need to burn the MXU on K=1.
        e = t * w
    else:
        # Lane-group replication + freq multiply fused into one MXU matmul. W has exactly
        # one nonzero per output column so there is no K-accumulation error; HIGHEST
        # precision keeps the product at f32 accuracy (the TPU default f32 dot truncates
        # through single-pass bf16, which would be far outside tolerance at |t| ~ 1e3).
        e = jnp.dot(t, w, preferred_element_type=jnp.float32,
                    precision=jax.lax.Precision.HIGHEST)

    # Single full-width lane-dense store; cos(x) == sin(x + pi/2).
    out_ref[...] = jnp.sin(e + phase)


def _jnp_embeddings(time: jax.Array, dim: int) -> jax.Array:
    """Plain-jnp path (exact PyTorch semantics); used for tiny shapes and as reference."""
    half = dim // 2
    scale = math.log(10000.0) / (half - 1)
    freqs = jnp.exp(jnp.arange(half, dtype=jnp.float32) * -scale)
    args = time.astype(jnp.float32)[:, None] * freqs[None, :]
    return jnp.concatenate([jnp.sin(args), jnp.cos(args)], axis=-1)


def sinusoidal_position_embeddings(time: jax.Array, dim: int, *,
                                   max_tile_bytes: int = _TILE_BYTES,
                                   min_pallas_out_bytes: int = _MIN_PALLAS_OUT_BYTES,
                                   force_pallas: bool = False) -> jax.Array:
    """time: (B,) -> (B, dim) float32 embeddings (PyTorch concat order: [sin | cos])."""
    assert dim % 2 == 0, "dim must be even"
    assert dim >= 4, "dim must be >= 4 (dim == 2 divides by zero, as in the PyTorch module)"
    b = time.shape[0]
    half = dim // 2

    # Tiny shapes (the diffusion-model production case, B~8) are launch-overhead bound as a
    # standalone custom call: let XLA fuse the plain-jnp version into the consumer instead.
    if not force_pallas and b * dim * 4 < min_pallas_out_bytes:
        return _jnp_embeddings(time, dim)

    # ---- Lane packing: put `pack` batch rows side by side so the lane axis is 128-dense.
    pack = math.lcm(dim, 128) // dim
    if pack > _MAX_PACK:
        pack = 1          # rare ragged dim: correct fallback (masked sub-128-lane stores)
    width = pack * dim

    # ---- Resident constants (computed once in the wrapper, never re-fetched per step).
    scale = math.log(10000.0) / (half - 1)
    freqs = jnp.exp(jnp.arange(half, dtype=jnp.float32) * -scale)                # (half,)
    freq_full = jnp.concatenate([freqs, freqs])                                  # (dim,)
    phase = jnp.concatenate([jnp.zeros((half,), jnp.float32),
                             jnp.full((half,), math.pi / 2, jnp.float32)])       # (dim,)
    group = jnp.arange(width, dtype=jnp.int32) // dim                            # (width,)
    sel = (group[None, :] == jnp.arange(pack, dtype=jnp.int32)[:, None])         # (pack,width)
    w_mat = sel.astype(jnp.float32) * jnp.tile(freq_full, pack)[None, :]         # (pack,width)
    resident = jnp.concatenate([w_mat, jnp.tile(phase, pack)[None, :]], axis=0)  # (pack+1,width)

    # ---- Row tiling: biggest block under the budget; multiple of 8 sublanes; >=2 grid
    #      steps when rows >= 16 so v7x's two TensorCores both get work.
    rows = pl.cdiv(b, pack)
    tile_rows = max(8, (max_tile_bytes // (width * 4)) // 8 * 8)
    tile_rows = min(tile_rows, _round_up(rows, 8))
    if rows >= 16:
        tile_rows = min(tile_rows, _round_up(pl.cdiv(rows, 2), 8))
    rows_pad = _round_up(rows, tile_rows)
    b_pad = rows_pad * pack

    t = time.astype(jnp.float32)
    if b_pad != b:
        t = jnp.pad(t, (0, b_pad - b))          # padded rows are discarded by the final slice
    t2d = t.reshape(rows_pad, pack)

    grid = (rows_pad // tile_rows,)
    out_packed = pl.pallas_call(
        _sinusoidal_kernel,
        out_shape=jax.ShapeDtypeStruct((rows_pad, width), jnp.float32),
        grid_spec=pltpu.PrefetchScalarGridSpec(
            num_scalar_prefetch=0,
            grid=grid,
            in_specs=[
                pl.BlockSpec((tile_rows, pack), lambda i: (i, 0)),
                pl.BlockSpec((pack + 1, width), lambda i: (0, 0)),   # resident constants
            ],
            out_specs=pl.BlockSpec((tile_rows, width), lambda i: (i, 0)),
        ),
        compiler_params=pltpu.CompilerParams(
            dimension_semantics=("parallel",),            # shard batch grid on v7x megacore
            vmem_limit_bytes=_VMEM_LIMIT_BYTES),          # 2x8 MiB out + t blocks + resident
        cost_estimate=pl.CostEstimate(
            flops=2 * b_pad * dim,
            transcendentals=b_pad * dim,
            bytes_accessed=4 * (b_pad + (pack + 1) * width + rows_pad * width)),
    )(t2d, resident)

    out = out_packed.reshape(b_pad, dim)        # free contiguous un-pack
    if b_pad != b:
        out = out[:b]
    return out


def _check(time, dim, **kw):
    out = jax.block_until_ready(sinusoidal_position_embeddings(time, dim, **kw))
    ref = _jnp_embeddings(time, dim)
    assert out.shape == (time.shape[0], dim) and out.dtype == jnp.float32
    # Error budget: the multi-pass f32 MXU product and the sin(x + pi/2) identity both
    # perturb the *argument* by a tiny multiple of its own magnitude; |d sin/dx| <= 1, so
    # bound the output error by (1e-5 + 1e-4 * |t * freq|). Structural errors are O(1).
    half = dim // 2
    scale = math.log(10000.0) / (half - 1)
    freqs = jnp.exp(jnp.arange(half, dtype=jnp.float32) * -scale)
    arg_mag = jnp.abs(time.astype(jnp.float32)[:, None] * freqs[None, :])
    tol = 1e-5 + 1e-4 * jnp.concatenate([arg_mag, arg_mag], axis=-1)
    err = jnp.abs(out - ref)
    assert bool(jnp.all(err <= tol)), (
        f"mismatch vs reference (dim={dim}, max err={float(err.max())})")


if __name__ == "__main__":
    key = jax.random.PRNGKey(0)
    ks = jax.random.split(key, 6)

    # Primary diffusion-model shape (B=8, dim=32): tiny -> auto-dispatches to the jnp path.
    t_small = jax.random.uniform(ks[0], (8,), dtype=jnp.float32) * 1000.0
    _check(t_small, 32)
    # Same shape forced through the Pallas kernel (pack=4, width=128, single grid step).
    _check(t_small, 32, force_pallas=True)

    # Larger batch: auto Pallas path; rows >= 16 so the grid has >= 2 steps (v7x megacore).
    _check(jax.random.uniform(ks[1], (1024,), dtype=jnp.float32) * 1000.0, 32)

    # dim=96: generalized packing (pack=4, width=384) instead of masked 96-lane stores.
    _check(jax.random.uniform(ks[2], (512,), dtype=jnp.float32) * 1000.0, 96)

    # dim=4 -> pack=32 (K=32 selection matmul) with ragged batch padding.
    _check(jax.random.uniform(ks[3], (200,), dtype=jnp.float32) * 1000.0, 4, force_pallas=True)

    # dim=128 -> pack=1 VPU-broadcast branch, 2 grid steps.
    _check(jax.random.uniform(ks[4], (64,), dtype=jnp.float32) * 1000.0, 128, force_pallas=True)

    # Multi-step grid with a tiny tile budget + batch padding (exercises pipelining).
    _check(jax.random.uniform(ks[5], (40,), dtype=jnp.float32) * 1000.0, 64,
           force_pallas=True, max_tile_bytes=8 * 128 * 4)

    print("KERNEL_OK")
</pallas_src>

<mosaic_0001>
module attributes {stable_mosaic.version = 11 : i64} {
  func.func @_sinusoidal_kernel(%arg0: i32, %arg1: memref<8x4xf32, #tpu.memory_space<vmem>>, %arg2: memref<5x128xf32, #tpu.memory_space<vmem>>, %arg3: memref<8x128xf32, #tpu.memory_space<vmem>>) attributes {dimension_semantics = [#tpu.dimension_semantics<parallel>], iteration_bounds = array<i64: 1>, scalar_prefetch = 0 : i64, scratch_operands = 0 : i64, tpu.core_type = #tpu.core_type<tc>, window_params = [{transform_indices = @transform_0, window_bounds = array<i64: 8, 4>}, {pipeline_mode = #tpu.pipeline_mode<synchronous>, transform_indices = @transform_1, window_bounds = array<i64: 5, 128>}, {transform_indices = @transform_2, window_bounds = array<i64: 8, 128>}]} {
    %c0 = arith.constant 0 : index
    %c0_0 = arith.constant 0 : index
    %0 = vector.load %arg1[%c0, %c0_0] : memref<8x4xf32, #tpu.memory_space<vmem>>, vector<8x4xf32>
    %c0_1 = arith.constant 0 : index
    %c0_2 = arith.constant 0 : index
    %1 = vector.load %arg2[%c0_1, %c0_2] : memref<5x128xf32, #tpu.memory_space<vmem>>, vector<4x128xf32>
    %c4 = arith.constant 4 : index
    %c0_3 = arith.constant 0 : index
    %2 = vector.load %arg2[%c4, %c0_3] : memref<5x128xf32, #tpu.memory_space<vmem>>, vector<1x128xf32>
    %cst = arith.constant dense<0.000000e+00> : vector<8x128xf32>
    %3 = tpu.matmul %0, %1, %cst {dimension_numbers = #tpu.dot_dimension_numbers<[1], [0], [0], [1], [0, 0, 1, 1], [], []>, precision = #tpu.contract_precision<fp32>} : vector<8x4xf32>, vector<4x128xf32>, vector<8x128xf32> -> vector<8x128xf32>
    %4 = vector.broadcast %2 : vector<1x128xf32> to vector<8x128xf32>
    %5 = arith.addf %3, %4 : vector<8x128xf32>
    %6 = math.sin %5 : vector<8x128xf32>
    %c0_4 = arith.constant 0 : index
    %c0_5 = arith.constant 0 : index
    %7 = vector.load %arg3[%c0_4, %c0_5] : memref<8x128xf32, #tpu.memory_space<vmem>>, vector<8x128xf32>
    tpu.vector_store %arg3[%c0_4, %c0_5], %6 {strides = array<i32>} : memref<8x128xf32, #tpu.memory_space<vmem>>, vector<8x128xf32>,
    return
  }
  func.func @transform_0(%arg0: i32) -> (i32, i32) {
    %c0_i32 = arith.constant 0 : i32
    %c0_i32_0 = arith.constant 0 : i32
    return %arg0, %c0_i32 : i32, i32
  }
  func.func @transform_1(%arg0: i32) -> (i32, i32) {
    %c0_i32 = arith.constant 0 : i32
    %c0_i32_0 = arith.constant 0 : i32
    %c0_i32_1 = arith.constant 0 : i32
    return %c0_i32, %c0_i32_0 : i32, i32
  }
  func.func @transform_2(%arg0: i32) -> (i32, i32) {
    %c0_i32 = arith.constant 0 : i32
    %c0_i32_0 = arith.constant 0 : i32
    return %arg0, %c0_i32 : i32, i32
  }
}

</mosaic_0001>

<llo_original>
// kernel: tpu_custom_call.1
$region0: #{tpu_custom_call.1}
  #allocation0 [shape = 'u32[]', space=smem, size = 0x4, offset = 0x4, fixed_abs, tag = 'smem constant byte address 0x4 - core index']
  #allocation1 [shape = 'u32[144,128]{1,0:T(1,128)}', space=vmem, size = 0x12000, scoped, tag = 'internal scratch']
  %s0 = inlined_call_operand.vmem [shape: f32[8,4], index: 0, kind: input, shape index: {}]
  %s1 = inlined_call_operand.vmem [shape: f32[5,128], index: 1, kind: input, shape index: {}]
  %s2 = inlined_call_operand.hbm [shape: f32[8,128], index: 2, kind: output, shape index: {}]
  %s3 = sld [smem:[#allocation0]]
  $region18: #{tpu_custom_call.1} parent=0
    _
  %s5 = ssub.s32 1, %s3
  %s6 = scalar_select 0, %s5, %s3
  $region1: #{tpu_custom_call.1} parent=0
    #allocation2 [shape = 'u8[4096]{0}', space=vmem, size = 0x1000, scoped, tag = 'output window, operand 0, single buffered']
    #allocation3 [shape = 's32[1]{0}', space=sflag, size = 0x4, scoped, tag = 'scoped memory for tpu_custom_call.1']
    %7 = vsyncpa [#allocation3], 0
    // Predicated region
    $region2: #{tpu_custom_call.1} parent=1 // pred_check
      _
    $region3: #{tpu_custom_call.1} parent=1 // pred_check_branch
      %9 = sbr.rel (0) target = $region5
    $region4: #{tpu_custom_call.1} parent=1 // pred_region
      _
    $region5: #{tpu_custom_call.1} parent=1 // pred_fallthru
      _
    // Predicated region
    $region6: #{tpu_custom_call.1} parent=1 // pred_check
      _
    $region7: #{tpu_custom_call.1} parent=1 // pred_check_branch
      %11 = sbr.rel (0) target = $region9
    $region8: #{tpu_custom_call.1} parent=1 // pred_region
      _
    $region9: #{tpu_custom_call.1} parent=1 // pred_fallthru
      _
    %v12 = vld [vmem:[%s0] sm:$0xff]
    %v13 = vld [vmem:[%s1] sm:$0xf]
    %v14 = vld [vmem:[%s1 + $0x4] sm:$0x1]
    %v15 = vlaneseq
    %v16 = vshrl.u32 %v15, 7
    %v17 = vsub.s32 0, %v16
    %v18 = vrot.slane %v14, %v17
    %vm19 = vcmask 31744
    %v21 = vsel %vm19, %v12, 0
    %vm23 = vcmask 1043456
    %v25 = vsel %vm23, %v13, 0
    %27 = vmatprep.subr.mxu0 0.0
    %v28 = vand.u32 %v25, 4294901760
    %29 = vmatpush1.msra.mxu0 %v28
    %30 = vmatprep.subr.mxu0 0.0
    %31 = vmatpush1.msra.mxu0 0.0
    %32 = vmatprep.subr.mxu0 0.0
    %33 = vmatpush1.msra.mxu0 0.0
    %34 = vmatprep.subr.mxu0 0.0
    %35 = vmatpush1.msra.mxu0 0.0
    %36 = vmatprep.subr.mxu0 0.0
    %37 = vmatpush1.msra.mxu0 0.0
    %38 = vmatprep.subr.mxu0 0.0
    %39 = vmatpush1.msra.mxu0 0.0
    %40 = vmatprep.subr.mxu0 0.0
    %41 = vmatpush1.msra.mxu0 0.0
    %42 = vmatprep.subr.mxu0 0.0
    %43 = vmatpush1.msra.mxu0 0.0
    %44 = vmatprep.subr.mxu0 0.0
    %45 = vmatpush1.msra.mxu0 0.0
    %46 = vmatprep.subr.mxu0 0.0
    %47 = vmatpush1.msra.mxu0 0.0
    %48 = vmatprep.subr.mxu0 0.0
    %49 = vmatpush1.msra.mxu0 0.0
    %50 = vmatprep.subr.mxu0 0.0
    %51 = vmatpush1.msra.mxu0 0.0
    %52 = vmatprep.subr.mxu0 0.0
    %53 = vmatpush1.msra.mxu0 0.0
    %54 = vmatprep.subr.mxu0 0.0
    %55 = vmatpush1.msra.mxu0 0.0
    %56 = vmatprep.subr.mxu0 0.0
    %57 = vmatpush1.msra.mxu0 0.0
    %58 = vmatprep.subr.mxu0 0.0
    %59 = vmatpush1.msra.mxu0 0.0
    %60 = vmatprep.subr.mxu0 0.0
    %61 = vmatpush1.msra.mxu0 0.0
    %62 = vmatprep.subr.mxu0 0.0
    %63 = vmatpush1.msra.mxu0 0.0
    %64 = vmatprep.subr.mxu0 0.0
    %65 = vmatpush1.msra.mxu0 0.0
    %66 = vmatprep.subr.mxu0 0.0
    %67 = vmatpush1.msra.mxu0 0.0
    %68 = vmatprep.subr.mxu0 0.0
    %69 = vmatpush1.msra.mxu0 0.0
    %70 = vmatprep.subr.mxu0 0.0
    %71 = vmatpush1.msra.mxu0 0.0
    %72 = vmatprep.subr.mxu0 0.0
    %73 = vmatpush1.msra.mxu0 0.0
    %74 = vmatprep.subr.mxu0 0.0
    %75 = vmatpush1.msra.mxu0 0.0
    %76 = vmatprep.subr.mxu0 0.0
    %77 = vmatpush1.msra.mxu0 0.0
    %78 = vmatprep.subr.mxu0 0.0
    %79 = vmatpush1.msra.mxu0 0.0
    %80 = vmatprep.subr.mxu0 0.0
    %81 = vmatpush1.msra.mxu0 0.0
    %82 = vmatprep.subr.mxu0 0.0
    %83 = vmatpush1.msra.mxu0 0.0
    %84 = vmatprep.subr.mxu0 0.0
    %85 = vmatpush1.msra.mxu0 0.0
    %86 = vmatprep.subr.mxu0 0.0
    %87 = vmatpush1.msra.mxu0 0.0
    %88 = vmatprep.subr.mxu0 0.0
    %89 = vmatpush1.msra.mxu0 0.0
    %90 = vmatprep.subr.mxu0 0.0
    %91 = vmatpush1.msra.mxu0 0.0
    %92 = vmatprep.mubr.f32.mxu0 0.0
    %v93 = vand.u32 %v21, 4294901760
    %v94 = vsub.f32 %v21, %v93
    %v95 = vand.u32 %v94, 4294901760
    %v96 = vsub.f32 %v94, %v95
    %v97 = vand.u32 %v96, 4294901760
    %98 = vmatmul.mubr.f32.gmra.mrb[0].mxu0 %v97
    %v99 = vpop.f32.mrb[0].mxu0
    %v100 = vadd.f32 %v18, %v99
    %v101 = vpop.f32.mrb[0].mxu0
    %102 = vdwg.mxu0
    %103 = vmatprep.subr.mxu0 0.0
    %v104 = vand.u32 %v25, 4294901760
    %v105 = vsub.f32 %v25, %v104
    %v106 = vand.u32 %v105, 4294901760
    %v107 = vsub.f32 %v105, %v106
    %v108 = vand.u32 %v107, 4294901760
    %109 = vmatpush1.msra.mxu0 %v108
    %110 = vmatprep.subr.mxu0 0.0
    %111 = vmatpush1.msra.mxu0 0.0
    %112 = vmatprep.subr.mxu0 0.0
    %113 = vmatpush1.msra.mxu0 0.0
    %114 = vmatprep.subr.mxu0 0.0
    %115 = vmatpush1.msra.mxu0 0.0
    %116 = vmatprep.subr.mxu0 0.0
    %117 = vmatpush1.msra.mxu0 0.0
    %118 = vmatprep.subr.mxu0 0.0
    %119 = vmatpush1.msra.mxu0 0.0
    %120 = vmatprep.subr.mxu0 0.0
    %121 = vmatpush1.msra.mxu0 0.0
    %122 = vmatprep.subr.mxu0 0.0
    %123 = vmatpush1.msra.mxu0 0.0
    %124 = vmatprep.subr.mxu0 0.0
    %125 = vmatpush1.msra.mxu0 0.0
    %126 = vmatprep.subr.mxu0 0.0
    %127 = vmatpush1.msra.mxu0 0.0
    %128 = vmatprep.subr.mxu0 0.0
    %129 = vmatpush1.msra.mxu0 0.0
    %130 = vmatprep.subr.mxu0 0.0
    %131 = vmatpush1.msra.mxu0 0.0
    %132 = vmatprep.subr.mxu0 0.0
    %133 = vmatpush1.msra.mxu0 0.0
    %134 = vmatprep.subr.mxu0 0.0
    %135 = vmatpush1.msra.mxu0 0.0
    %136 = vmatprep.subr.mxu0 0.0
    %137 = vmatpush1.msra.mxu0 0.0
    %138 = vmatprep.subr.mxu0 0.0
    %139 = vmatpush1.msra.mxu0 0.0
    %140 = vmatprep.subr.mxu0 0.0
    %141 = vmatpush1.msra.mxu0 0.0
    %142 = vmatprep.subr.mxu0 0.0
    %143 = vmatpush1.msra.mxu0 0.0
    %144 = vmatprep.subr.mxu0 0.0
    %145 = vmatpush1.msra.mxu0 0.0
    %146 = vmatprep.subr.mxu0 0.0
    %147 = vmatpush1.msra.mxu0 0.0
    %148 = vmatprep.subr.mxu0 0.0
    %149 = vmatpush1.msra.mxu0 0.0
    %150 = vmatprep.subr.mxu0 0.0
    %151 = vmatpush1.msra.mxu0 0.0
    %152 = vmatprep.subr.mxu0 0.0
    %153 = vmatpush1.msra.mxu0 0.0
    %154 = vmatprep.subr.mxu0 0.0
    %155 = vmatpush1.msra.mxu0 0.0
    %156 = vmatprep.subr.mxu0 0.0
    %157 = vmatpush1.msra.mxu0 0.0
    %158 = vmatprep.subr.mxu0 0.0
    %159 = vmatpush1.msra.mxu0 0.0
    %160 = vmatprep.subr.mxu0 0.0
    %161 = vmatpush1.msra.mxu0 0.0
    %162 = vmatprep.subr.mxu0 0.0
    %163 = vmatpush1.msra.mxu0 0.0
    %164 = vmatprep.subr.mxu0 0.0
    %165 = vmatpush1.msra.mxu0 0.0
    %166 = vmatprep.subr.mxu0 0.0
    %167 = vmatpush1.msra.mxu0 0.0
    %168 = vmatprep.subr.mxu0 0.0
    %169 = vmatpush1.msra.mxu0 0.0
    %170 = vmatprep.subr.mxu0 0.0
    %171 = vmatpush1.msra.mxu0 0.0
    %172 = vmatprep.mubr.f32.mxu0 0.0
    %v173 = vand.u32 %v21, 4294901760
    %174 = vmatmul.mubr.f32.gmra.mrb[0].mxu0 %v173
    %v175 = vpop.f32.mrb[0].mxu0
    %v176 = vadd.f32 %v100, %v175
    %v177 = vpop.f32.mrb[0].mxu0
    %178 = vdwg.mxu0
    %179 = vmatprep.subr.mxu0 0.0
    %v180 = vand.u32 %v25, 4294901760
    %v181 = vsub.f32 %v25, %v180
    %182 = vmatpush1.msra.mxu0 %v181
    %183 = vmatprep.subr.mxu0 0.0
    %184 = vmatpush1.msra.mxu0 0.0
    %185 = vmatprep.subr.mxu0 0.0
    %186 = vmatpush1.msra.mxu0 0.0
    %187 = vmatprep.subr.mxu0 0.0
    %188 = vmatpush1.msra.mxu0 0.0
    %189 = vmatprep.subr.mxu0 0.0
    %190 = vmatpush1.msra.mxu0 0.0
    %191 = vmatprep.subr.mxu0 0.0
    %192 = vmatpush1.msra.mxu0 0.0
    %193 = vmatprep.subr.mxu0 0.0
    %194 = vmatpush1.msra.mxu0 0.0
    %195 = vmatprep.subr.mxu0 0.0
    %196 = vmatpush1.msra.mxu0 0.0
    %197 = vmatprep.subr.mxu0 0.0
    %198 = vmatpush1.msra.mxu0 0.0
    %199 = vmatprep.subr.mxu0 0.0
    %200 = vmatpush1.msra.mxu0 0.0
    %201 = vmatprep.subr.mxu0 0.0
    %202 = vmatpush1.msra.mxu0 0.0
    %203 = vmatprep.subr.mxu0 0.0
    %204 = vmatpush1.msra.mxu0 0.0
    %205 = vmatprep.subr.mxu0 0.0
    %206 = vmatpush1.msra.mxu0 0.0
    %207 = vmatprep.subr.mxu0 0.0
    %208 = vmatpush1.msra.mxu0 0.0
    %209 = vmatprep.subr.mxu0 0.0
    %210 = vmatpush1.msra.mxu0 0.0
    %211 = vmatprep.subr.mxu0 0.0
    %212 = vmatpush1.msra.mxu0 0.0
    %213 = vmatprep.subr.mxu0 0.0
    %214 = vmatpush1.msra.mxu0 0.0
    %215 = vmatprep.subr.mxu0 0.0
    %216 = vmatpush1.msra.mxu0 0.0
    %217 = vmatprep.subr.mxu0 0.0
    %218 = vmatpush1.msra.mxu0 0.0
    %219 = vmatprep.subr.mxu0 0.0
    %220 = vmatpush1.msra.mxu0 0.0
    %221 = vmatprep.subr.mxu0 0.0
    %222 = vmatpush1.msra.mxu0 0.0
    %223 = vmatprep.subr.mxu0 0.0
    %224 = vmatpush1.msra.mxu0 0.0
    %225 = vmatprep.subr.mxu0 0.0
    %226 = vmatpush1.msra.mxu0 0.0
    %227 = vmatprep.subr.mxu0 0.0
    %228 = vmatpush1.msra.mxu0 0.0
    %229 = vmatprep.subr.mxu0 0.0
    %230 = vmatpush1.msra.mxu0 0.0
    %231 = vmatprep.subr.mxu0 0.0
    %232 = vmatpush1.msra.mxu0 0.0
    %233 = vmatprep.subr.mxu0 0.0
    %234 = vmatpush1.msra.mxu0 0.0
    %235 = vmatprep.subr.mxu0 0.0
    %236 = vmatpush1.msra.mxu0 0.0
    %237 = vmatprep.subr.mxu0 0.0
    %238 = vmatpush1.msra.mxu0 0.0
    %239 = vmatprep.subr.mxu0 0.0
    %240 = vmatpush1.msra.mxu0 0.0
    %241 = vmatprep.subr.mxu0 0.0
    %242 = vmatpush1.msra.mxu0 0.0
    %243 = vmatprep.subr.mxu0 0.0
    %244 = vmatpush1.msra.mxu0 0.0
    %245 = vmatprep.mubr.f32.mxu0 0.0
    %v246 = vand.u32 %v21, 4294901760
    %v247 = vsub.f32 %v21, %v246
    %248 = vmatmul.mubr.f32.gmra.mrb[0].mxu0 %v247
    %v249 = vpop.f32.mrb[0].mxu0
    %v250 = vadd.f32 %v176, %v249
    %v251 = vpop.f32.mrb[0].mxu0
    %252 = vdwg.mxu0
    %253 = vmatprep.subr.mxu0 0.0
    %v254 = vand.u32 %v25, 4294901760
    %255 = vmatpush1.msra.mxu0 %v254
    %256 = vmatprep.subr.mxu0 0.0
    %257 = vmatpush1.msra.mxu0 0.0
    %258 = vmatprep.subr.mxu0 0.0
    %259 = vmatpush1.msra.mxu0 0.0
    %260 = vmatprep.subr.mxu0 0.0
    %261 = vmatpush1.msra.mxu0 0.0
    %262 = vmatprep.subr.mxu0 0.0
    %263 = vmatpush1.msra.mxu0 0.0
    %264 = vmatprep.subr.mxu0 0.0
    %265 = vmatpush1.msra.mxu0 0.0
    %266 = vmatprep.subr.mxu0 0.0
    %267 = vmatpush1.msra.mxu0 0.0
    %268 = vmatprep.subr.mxu0 0.0
    %269 = vmatpush1.msra.mxu0 0.0
    %270 = vmatprep.subr.mxu0 0.0
    %271 = vmatpush1.msra.mxu0 0.0
    %272 = vmatprep.subr.mxu0 0.0
    %273 = vmatpush1.msra.mxu0 0.0
    %274 = vmatprep.subr.mxu0 0.0
    %275 = vmatpush1.msra.mxu0 0.0
    %276 = vmatprep.subr.mxu0 0.0
    %277 = vmatpush1.msra.mxu0 0.0
    %278 = vmatprep.subr.mxu0 0.0
    %279 = vmatpush1.msra.mxu0 0.0
    %280 = vmatprep.subr.mxu0 0.0
    %281 = vmatpush1.msra.mxu0 0.0
    %282 = vmatprep.subr.mxu0 0.0
    %283 = vmatpush1.msra.mxu0 0.0
    %284 = vmatprep.subr.mxu0 0.0
    %285 = vmatpush1.msra.mxu0 0.0
    %286 = vmatprep.subr.mxu0 0.0
    %287 = vmatpush1.msra.mxu0 0.0
    %288 = vmatprep.subr.mxu0 0.0
    %289 = vmatpush1.msra.mxu0 0.0
    %290 = vmatprep.subr.mxu0 0.0
    %291 = vmatpush1.msra.mxu0 0.0
    %292 = vmatprep.subr.mxu0 0.0
    %293 = vmatpush1.msra.mxu0 0.0
    %294 = vmatprep.subr.mxu0 0.0
    %295 = vmatpush1.msra.mxu0 0.0
    %296 = vmatprep.subr.mxu0 0.0
    %297 = vmatpush1.msra.mxu0 0.0
    %298 = vmatprep.subr.mxu0 0.0
    %299 = vmatpush1.msra.mxu0 0.0
    %300 = vmatprep.subr.mxu0 0.0
    %301 = vmatpush1.msra.mxu0 0.0
    %302 = vmatprep.subr.mxu0 0.0
    %303 = vmatpush1.msra.mxu0 0.0
    %304 = vmatprep.subr.mxu0 0.0
    %305 = vmatpush1.msra.mxu0 0.0
    %306 = vmatprep.subr.mxu0 0.0
    %307 = vmatpush1.msra.mxu0 0.0
    %308 = vmatprep.subr.mxu0 0.0
    %309 = vmatpush1.msra.mxu0 0.0
    %310 = vmatprep.subr.mxu0 0.0
    %311 = vmatpush1.msra.mxu0 0.0
    %312 = vmatprep.subr.mxu0 0.0
    %313 = vmatpush1.msra.mxu0 0.0
    %314 = vmatprep.subr.mxu0 0.0
    %315 = vmatpush1.msra.mxu0 0.0
    %316 = vmatprep.subr.mxu0 0.0
    %317 = vmatpush1.msra.mxu0 0.0
    %318 = vmatprep.mubr.f32.mxu0 0.0
    %v319 = vand.u32 %v21, 4294901760
    %v320 = vsub.f32 %v21, %v319
    %v321 = vand.u32 %v320, 4294901760
    %322 = vmatmul.mubr.f32.gmra.mrb[0].mxu0 %v321
    %v323 = vpop.f32.mrb[0].mxu0
    %v324 = vadd.f32 %v250, %v323
    %v325 = vpop.f32.mrb[0].mxu0
    %326 = vdwg.mxu0
    %327 = vmatprep.subr.mxu0 0.0
    %v328 = vand.u32 %v25, 4294901760
    %v329 = vsub.f32 %v25, %v328
    %v330 = vand.u32 %v329, 4294901760
    %331 = vmatpush1.msra.mxu0 %v330
    %332 = vmatprep.subr.mxu0 0.0
    %333 = vmatpush1.msra.mxu0 0.0
    %334 = vmatprep.subr.mxu0 0.0
    %335 = vmatpush1.msra.mxu0 0.0
    %336 = vmatprep.subr.mxu0 0.0
    %337 = vmatpush1.msra.mxu0 0.0
    %338 = vmatprep.subr.mxu0 0.0
    %339 = vmatpush1.msra.mxu0 0.0
    %340 = vmatprep.subr.mxu0 0.0
    %341 = vmatpush1.msra.mxu0 0.0
    %342 = vmatprep.subr.mxu0 0.0
    %343 = vmatpush1.msra.mxu0 0.0
    %344 = vmatprep.subr.mxu0 0.0
    %345 = vmatpush1.msra.mxu0 0.0
    %346 = vmatprep.subr.mxu0 0.0
    %347 = vmatpush1.msra.mxu0 0.0
    %348 = vmatprep.subr.mxu0 0.0
    %349 = vmatpush1.msra.mxu0 0.0
    %350 = vmatprep.subr.mxu0 0.0
    %351 = vmatpush1.msra.mxu0 0.0
    %352 = vmatprep.subr.mxu0 0.0
    %353 = vmatpush1.msra.mxu0 0.0
    %354 = vmatprep.subr.mxu0 0.0
    %355 = vmatpush1.msra.mxu0 0.0
    %356 = vmatprep.subr.mxu0 0.0
    %357 = vmatpush1.msra.mxu0 0.0
    %358 = vmatprep.subr.mxu0 0.0
    %359 = vmatpush1.msra.mxu0 0.0
    %360 = vmatprep.subr.mxu0 0.0
    %361 = vmatpush1.msra.mxu0 0.0
    %362 = vmatprep.subr.mxu0 0.0
    %363 = vmatpush1.msra.mxu0 0.0
    %364 = vmatprep.subr.mxu0 0.0
    %365 = vmatpush1.msra.mxu0 0.0
    %366 = vmatprep.subr.mxu0 0.0
    %367 = vmatpush1.msra.mxu0 0.0
    %368 = vmatprep.subr.mxu0 0.0
    %369 = vmatpush1.msra.mxu0 0.0
    %370 = vmatprep.subr.mxu0 0.0
    %371 = vmatpush1.msra.mxu0 0.0
    %372 = vmatprep.subr.mxu0 0.0
    %373 = vmatpush1.msra.mxu0 0.0
    %374 = vmatprep.subr.mxu0 0.0
    %375 = vmatpush1.msra.mxu0 0.0
    %376 = vmatprep.subr.mxu0 0.0
    %377 = vmatpush1.msra.mxu0 0.0
    %378 = vmatprep.subr.mxu0 0.0
    %379 = vmatpush1.msra.mxu0 0.0
    %380 = vmatprep.subr.mxu0 0.0
    %381 = vmatpush1.msra.mxu0 0.0
    %382 = vmatprep.subr.mxu0 0.0
    %383 = vmatpush1.msra.mxu0 0.0
    %384 = vmatprep.subr.mxu0 0.0
    %385 = vmatpush1.msra.mxu0 0.0
    %386 = vmatprep.subr.mxu0 0.0
    %387 = vmatpush1.msra.mxu0 0.0
    %388 = vmatprep.subr.mxu0 0.0
    %389 = vmatpush1.msra.mxu0 0.0
    %390 = vmatprep.subr.mxu0 0.0
    %391 = vmatpush1.msra.mxu0 0.0
    %392 = vmatprep.subr.mxu0 0.0
    %393 = vmatpush1.msra.mxu0 0.0
    %394 = vmatprep.mubr.f32.mxu0 0.0
    %v395 = vand.u32 %v21, 4294901760
    %396 = vmatmul.mubr.f32.gmra.mrb[0].mxu0 %v395
    %v397 = vpop.f32.mrb[0].mxu0
    %v398 = vadd.f32 %v324, %v397
    %v399 = vpop.f32.mrb[0].mxu0
    %400 = vdwg.mxu0
    %401 = vmatprep.subr.mxu0 0.0
    %v402 = vand.u32 %v25, 4294901760
    %403 = vmatpush1.msra.mxu0 %v402
    %404 = vmatprep.subr.mxu0 0.0
    %405 = vmatpush1.msra.mxu0 0.0
    %406 = vmatprep.subr.mxu0 0.0
    %407 = vmatpush1.msra.mxu0 0.0
    %408 = vmatprep.subr.mxu0 0.0
    %409 = vmatpush1.msra.mxu0 0.0
    %410 = vmatprep.subr.mxu0 0.0
    %411 = vmatpush1.msra.mxu0 0.0
    %412 = vmatprep.subr.mxu0 0.0
    %413 = vmatpush1.msra.mxu0 0.0
    %414 = vmatprep.subr.mxu0 0.0
    %415 = vmatpush1.msra.mxu0 0.0
    %416 = vmatprep.subr.mxu0 0.0
    %417 = vmatpush1.msra.mxu0 0.0
    %418 = vmatprep.subr.mxu0 0.0
    %419 = vmatpush1.msra.mxu0 0.0
    %420 = vmatprep.subr.mxu0 0.0
    %421 = vmatpush1.msra.mxu0 0.0
    %422 = vmatprep.subr.mxu0 0.0
    %423 = vmatpush1.msra.mxu0 0.0
    %424 = vmatprep.subr.mxu0 0.0
    %425 = vmatpush1.msra.mxu0 0.0
    %426 = vmatprep.subr.mxu0 0.0
    %427 = vmatpush1.msra.mxu0 0.0
    %428 = vmatprep.subr.mxu0 0.0
    %429 = vmatpush1.msra.mxu0 0.0
    %430 = vmatprep.subr.mxu0 0.0
    %431 = vmatpush1.msra.mxu0 0.0
    %432 = vmatprep.subr.mxu0 0.0
    %433 = vmatpush1.msra.mxu0 0.0
    %434 = vmatprep.subr.mxu0 0.0
    %435 = vmatpush1.msra.mxu0 0.0
    %436 = vmatprep.subr.mxu0 0.0
    %437 = vmatpush1.msra.mxu0 0.0
    %438 = vmatprep.subr.mxu0 0.0
    %439 = vmatpush1.msra.mxu0 0.0
    %440 = vmatprep.subr.mxu0 0.0
    %441 = vmatpush1.msra.mxu0 0.0
    %442 = vmatprep.subr.mxu0 0.0
    %443 = vmatpush1.msra.mxu0 0.0
    %444 = vmatprep.subr.mxu0 0.0
    %445 = vmatpush1.msra.mxu0 0.0
    %446 = vmatprep.subr.mxu0 0.0
    %447 = vmatpush1.msra.mxu0 0.0
    %448 = vmatprep.subr.mxu0 0.0
    %449 = vmatpush1.msra.mxu0 0.0
    %450 = vmatprep.subr.mxu0 0.0
    %451 = vmatpush1.msra.mxu0 0.0
    %452 = vmatprep.subr.mxu0 0.0
    %453 = vmatpush1.msra.mxu0 0.0
    %454 = vmatprep.subr.mxu0 0.0
    %455 = vmatpush1.msra.mxu0 0.0
    %456 = vmatprep.subr.mxu0 0.0
    %457 = vmatpush1.msra.mxu0 0.0
    %458 = vmatprep.subr.mxu0 0.0
    %459 = vmatpush1.msra.mxu0 0.0
    %460 = vmatprep.subr.mxu0 0.0
    %461 = vmatpush1.msra.mxu0 0.0
    %462 = vmatprep.subr.mxu0 0.0
    %463 = vmatpush1.msra.mxu0 0.0
    %464 = vmatprep.subr.mxu0 0.0
    %465 = vmatpush1.msra.mxu0 0.0
    %466 = vmatprep.mubr.f32.mxu0 0.0
    %v467 = vand.u32 %v21, 4294901760
    %468 = vmatmul.mubr.f32.gmra.mrb[0].mxu0 %v467
    %v469 = vpop.f32.mrb[0].mxu0
    %v470 = vadd.f32 %v398, %v469
    %v471 = vpop.f32.mrb[0].mxu0
    %472 = vdwg.mxu0
    %v473 = vand.u32 2147483647, %v470
    %vm474 = vcmp.le.f32.partialorder %v473, 0.7853982
    %vm475 = vcmp.lt.s32.totalorder %v470, 0
    %v476 = vand.u32 %v470, 2139095040
    %v477 = vshrl.u32 %v476, 23
    %v478 = vsub.s32 %v477, 127
    %v479 = vand.u32 2147483647, %v470
    %v480 = vand.u32 %v479, 8388607
    %v481 = vor.u32 %v480, 8388608
    %v482 = vsub.s32 0, %v481
    %v483 = vadd.s32 %v478, 1
    %vm484 = vcmp.gt.s32.totalorder %v483, 0
    %v485 = vsel %vm484, %v483, 0
    %v486 = vshrl.u32 %v485, 5
    %v487 = vand.u32 %v485, 31
    %v488 = vsub.s32 32, %v487
    %v489 = vshrl.u32 683565275, %v488
    %v490 = vshll.u32 683565275, %v487
    %v491 = vshrl.u32 2475754826, %v488
    %v492 = vor.u32 %v490, %v491
    %v493 = vshll.u32 2475754826, %v487
    %v494 = vshrl.u32 2131351028, %v488
    %v495 = vor.u32 %v493, %v494
    %v496 = vshll.u32 2131351028, %v487
    %v497 = vshrl.u32 2102212464, %v488
    %v498 = vor.u32 %v496, %v497
    %v499 = vshll.u32 2102212464, %v487
    %v500 = vshrl.u32 920167782, %v488
    %v501 = vor.u32 %v499, %v500
    %v502 = vshll.u32 920167782, %v487
    %v503 = vshrl.u32 1326507024, %v488
    %v504 = vor.u32 %v502, %v503
    %vm505 = vcmp.lt.s32.totalorder %v486, 1
    %vm506 = vcmp.lt.s32.totalorder %v486, 2
    %vm507 = vcmp.lt.s32.totalorder %v486, 3
    %vm508 = vcmp.lt.s32.totalorder %v486, 4
    %v509 = vsel %vm505, %v489, %v492
    %v510 = vsel %vm508, %v498, 2102212464
    %v511 = vsel %vm507, %v495, %v510
    %v512 = vsel %vm506, %v509, %v511
    %v513 = vsel %vm505, %v492, %v495
    %v514 = vsel %vm508, %v501, 920167782
    %v515 = vsel %vm507, %v498, %v514
    %v516 = vsel %vm506, %v513, %v515
    %v517 = vsel %vm505, %v495, %v498
    %v518 = vsel %vm508, %v504, 1326507024
    %v519 = vsel %vm507, %v501, %v518
    %v520 = vsel %vm506, %v517, %v519
    %v521 = vshll.u32 %v481, 8
    %v522 = vmul.u32.u64.compose %v521, %v520
    %v523 = vextract.low.u32 %v522
    %v524 = vextract.high.u32 %v522
    %v525 = vmul.u32.u64.compose %v521, %v516
    %v526 = vextract.low.u32 %v525
    %v527 = vextract.high.u32 %v525
    %v528 = vmul.u32 %v521, %v512
    %v529 = vadd.s32 %v524, %v526
    %vm530 = vc.u32 %v524, %v526
    %v531 = vadd.s32 %v527, 1
    %v532 = vsel %vm530, %v531, %v527
    %v533 = vadd.s32 %v528, %v532
    %v534 = vadd.s32 %v533, 536870912
    %v535 = vshrl.u32 %v534, 30
    %v536 = vshll.u32 %v535, 30
    %v537 = vsub.s32 %v533, %v536
    %vm538 = vcmp.lt.s32.totalorder %v537, 0
    %v539 = vsub.s32 0, %v537
    %v540 = vsel %vm538, %v539, %v537
    %v541 = vclz %v540
    %v542 = vsub.s32 %v541, 2
    %vm543 = vcmp.gt.s32.totalorder 0, %v542
    %v544 = vsel %vm543, 0, %v542
    %v545 = vsub.s32 32, %v544
    %v546 = vshll.u32 %v537, %v544
    %v547 = vshrl.u32 %v529, %v545
    %v548 = vor.u32 %v546, %v547
    %v549 = vsub.s32 4294967266, %v544
    %v550 = vadd.s32 %v549, 127
    %v551 = vshll.u32 %v550, 23
    %v552 = vor.u32 4788187, %v551
    %v553 = vand.u32 2147483647, %v552
    %v555 = vcvt.s32.f32 %v548
    %v556 = vmul.f32 %v555, %v553
    %v557 = vxor.u32 %v556, 2147483648
    %v558 = vsel %vm475, %v557, %v556
    %v559 = vsub.s32 4, %v535
    %v560 = vsel %vm475, %v559, %v535
    %v561 = vsel %vm474, %v470, %v558
    %v562 = vsel %vm474, 0, %v560
    %v563 = vcosq.f32.pop %v561
    %v564 = vsinq.f32.pop %v561
    %vm565 = vweird.f32 %v470
    %v566 = vadd.s32 %v562, 3
    %v567 = vand.u32 %v566, 3
    %vm568 = vcmp.lt.s32.totalorder %v567, 2
    %vm569 = vcmp.eq.s32.totalorder %v567, 0
    %v570 = vxor.u32 %v564, 2147483648
    %v571 = vsel %vm569, %v563, %v570
    %vm572 = vcmp.eq.s32.totalorder %v567, 2
    %v573 = vxor.u32 %v563, 2147483648
    %v574 = vsel %vm572, %v573, %v564
    %v575 = vsel %vm568, %v571, %v574
    %v576 = vsel %vm565, nan, %v575
    %577 = vst [vmem:[#allocation2] sm:$0xff] %v576
    // Predicated region
    $region10: #{tpu_custom_call.1} parent=1 // pred_check
      _
    $region11: #{tpu_custom_call.1} parent=1 // pred_check_branch
      %579 = sbr.rel (0) target = $region13
    $region12: #{tpu_custom_call.1} parent=1 // pred_region
      %s581 = ssub.s32 128, 128
      %582 = vsyncadd [#allocation3], %s581
      %s584 = sshll.u32 [#allocation2], 4
      %s585 = int_to_ptr.vmem [resolvable:$true] %s584
      %587 = dma.vmem_to_hbm [thread:$0]  %s585, 128, %s2, [#allocation3]
    $region13: #{tpu_custom_call.1} parent=1 // pred_fallthru
      _
    // Predicated region
    $region14: #{tpu_custom_call.1} parent=1 // pred_check
      _
    $region15: #{tpu_custom_call.1} parent=1 // pred_check_branch
      %589 = sbr.rel (0) target = $region17
    $region16: #{tpu_custom_call.1} parent=1 // pred_region
      %590 = dma.done [#allocation3], 128
    $region17: #{tpu_custom_call.1} parent=1 // pred_fallthru
      _
    %591 = vsyncpa [#allocation3], 1

</llo_original>
